<compile_context>
chip_gen: v7x
topology: tpu7x:2x2x1
jax: 0.10.0
libtpu: 0.0.40
codegen_flags: <defaults>
</compile_context>

<pallas_src>
import jax
import jax.numpy as jnp
from jax import lax
from jax.experimental import pallas as pl
from jax.experimental.pallas import tpu as pltpu


def _round_up(x, m):
    return ((x + m - 1) // m) * m


def _vmem_capacity_bytes():
    """Trace-time VMEM capacity query; conservative fallback = v7x per-TC 64 MiB."""
    try:
        return int(pltpu.get_tpu_info().vmem_capacity_bytes)
    except Exception:
        return 64 << 20


def _make_net_loss_kernel(tb, tk, d_in, d_out, n_rows):
    """Row tile x K tile: acc += x@W ; at last K step: pred = acc + b, partial SSE."""
    mask_rows = (n_rows % tb) != 0   # ragged last row block (undefined pad rows)
    mask_cols = (d_in % tk) != 0     # ragged last K block (undefined pad cols)

    def kernel(x_ref, w_ref, b_ref, y_ref, pred_ref, part_ref, acc_ref):
        i = pl.program_id(0)
        k = pl.program_id(1)

        @pl.when(k == 0)
        def _():
            acc_ref[...] = jnp.zeros_like(acc_ref)

        x = x_ref[...]
        if mask_cols:
            # Zero out-of-range K columns of the (padded) last block; W's padded
            # rows are zero by construction, so the contribution is exactly 0.
            col_ids = k * tk + lax.broadcasted_iota(jnp.int32, x.shape, 1)
            x = jnp.where(col_ids < d_in, x, 0.0)

        # bf16 cast happens in-register; x stays f32 in HBM (no wrapper copy).
        acc_ref[...] += jnp.dot(x.astype(jnp.bfloat16), w_ref[...],
                                preferred_element_type=jnp.float32)

        @pl.when(k == pl.num_programs(1) - 1)
        def _():
            # pred: lane-dense 128-wide bf16 store (padded lanes are exact zeros
            # because W/b columns >= d_out are zero-padded).
            pred_ref[...] = (acc_ref[...] + b_ref[...]).astype(pred_ref.dtype)

            # img2mse partial: f32 sum of squared error over valid lanes/rows of
            # this row tile (static ref slices are free).
            diff = (acc_ref[:, :d_out] + b_ref[:, :d_out]) - y_ref[...]
            if mask_rows:
                row_ids = i * tb + lax.broadcasted_iota(jnp.int32, diff.shape, 0)
                diff = jnp.where(row_ids < n_rows, diff, 0.0)
            part_ref[...] = jnp.sum(diff * diff, axis=0, keepdims=True)

    return kernel


def pallas_net(x_flat, w, b, target):
    """Synthetic inner net: returns dict with 'pred' and scalar 'loss'."""
    B, D_in = x_flat.shape
    D_out = w.shape[1]
    n_pad = _round_up(max(D_out, 128), 128)   # lane-dense MXU/output width

    vmem_cap = _vmem_capacity_bytes()
    budget = int(0.4 * vmem_cap)              # headroom for pipeline + compiler scratch

    # Row tile: big enough to amortize ~0.35us/step grid overhead, multiple of 16
    # (bf16 pred tiles), but <= cdiv(B,2) so the parallel row axis gives >= 2
    # blocks (both v7x TensorCores) whenever B allows it.
    if B <= 16:
        tb = B                                # single block == full dim (always legal)
    else:
        tb = min(1024, _round_up(pl.cdiv(B, 2), 16))
    g = pl.cdiv(B, tb)

    def vmem_need(tk):
        return (2 * tb * tk * 4               # x tile (f32, double-buffered)
                + 2 * tk * n_pad * 2          # W tile (bf16, double-buffered)
                + n_pad * 4                   # bias
                + 2 * tb * D_out * 4          # target tile
                + 2 * tb * n_pad * 2          # pred tile (bf16)
                + 2 * D_out * 4               # loss partials
                + tb * n_pad * 4)             # f32 accumulator scratch

    # K (D_in) tiling only when the whole reduction dim does not fit the budget.
    if vmem_need(D_in) <= budget:
        tk, kg = D_in, 1
    else:
        tk = 512
        while vmem_need(tk + 512) <= budget and tk + 512 < D_in:
            tk += 512
        kg = pl.cdiv(D_in, tk)
    k_rows = tk * kg                          # padded K extent for W (zeros)

    # Only the small parameter tensors are padded/cast in the wrapper; x and
    # target go straight to the kernel (no extra HBM round trip).
    w_p = jnp.pad(w.astype(jnp.float32),
                  ((0, k_rows - D_in), (0, n_pad - D_out))).astype(jnp.bfloat16)
    b_p = jnp.pad(b.astype(jnp.float32), ((0, 0), (0, n_pad - D_out)))
    x = x_flat.astype(jnp.float32)
    y = target.astype(jnp.float32)

    flops = 2 * B * D_in * n_pad + 4 * B * n_pad
    bytes_accessed = (x.size * 4 + w_p.size * 2 + b_p.size * 4 +
                      y.size * 4 + B * n_pad * 2 + g * D_out * 4)
    vmem_limit = int(min(0.9 * vmem_cap,
                         max(vmem_need(tk) + (4 << 20), 16 << 20)))

    pred_pad, partials = pl.pallas_call(
        _make_net_loss_kernel(tb, tk, D_in, D_out, B),
        out_shape=(
            jax.ShapeDtypeStruct((B, n_pad), jnp.bfloat16),   # pred (bf16 write)
            jax.ShapeDtypeStruct((g, D_out), jnp.float32),    # per-tile SSE rows
        ),
        grid_spec=pltpu.PrefetchScalarGridSpec(
            num_scalar_prefetch=0,
            grid=(g, kg),
            in_specs=[
                pl.BlockSpec((tb, tk), lambda i, k: (i, k)),     # x tile
                pl.BlockSpec((tk, n_pad), lambda i, k: (k, 0)),  # W (resident if kg==1)
                pl.BlockSpec((1, n_pad), lambda i, k: (0, 0)),   # bias resident
                pl.BlockSpec((tb, D_out), lambda i, k: (i, 0)),  # target tile
            ],
            out_specs=[
                pl.BlockSpec((tb, n_pad), lambda i, k: (i, 0)),  # pred tile
                pl.BlockSpec((1, D_out), lambda i, k: (i, 0)),   # loss partials
            ],
            scratch_shapes=[pltpu.VMEM((tb, n_pad), jnp.float32)],
        ),
        compiler_params=pltpu.CompilerParams(
            dimension_semantics=("parallel", "arbitrary"),
            vmem_limit_bytes=vmem_limit,
        ),
        cost_estimate=pl.CostEstimate(
            flops=flops, transcendentals=0, bytes_accessed=bytes_accessed),
    )(x, w_p, b_p, y)

    # Small slice (bf16 read, f32 write) only where pred is actually consumed.
    pred = pred_pad[:, :D_out].astype(jnp.float32)
    loss = jnp.sum(partials) / jnp.float32(B * D_out)
    return {"pred": pred, "loss": loss}


def network_wrapper_forward(batch, params):
    """Reproduces NetworkWrapper.forward semantics.

    batch: dict with 'img' (NCHW) and 'target' ([B, D_out]).
    Returns (ret, loss, scalar_stats, image_stats).
    """
    # TODO(synk): the trainer's checkpoint/optimizer plumbing and the generic
    # `net` module have no Pallas equivalent; only the net-forward + img2mse
    # hot path is in-kernel.
    x = batch["img"]
    B = x.shape[0]
    x_flat = x.reshape(B, -1).astype(jnp.float32)

    ret = pallas_net(x_flat, params["w"], params["b"], batch["target"])

    scalar_stats = {}
    loss = jnp.float32(0.0)
    loss = loss + ret["loss"]
    scalar_stats.update({"loss": loss})
    image_stats = {}
    return ret, loss, scalar_stats, image_stats


if __name__ == "__main__":
    key = jax.random.PRNGKey(0)
    k_img, k_tgt, k_w, k_b = jax.random.split(key, 4)

    B, C, H, W = 2, 4, 16, 16
    D_in = C * H * W          # 1024
    D_out = 32

    img = jax.random.normal(k_img, (B, C, H, W), dtype=jnp.float32)
    target = jax.random.normal(k_tgt, (B, D_out), dtype=jnp.float32)

    # Deterministic parameter init (synthetic; no checkpoint load).
    params = {
        "w": (jax.random.normal(k_w, (D_in, D_out), dtype=jnp.float32)
              * (1.0 / jnp.sqrt(jnp.float32(D_in)))),
        "b": jax.random.normal(k_b, (1, D_out), dtype=jnp.float32) * 0.01,
    }

    batch = {"img": img, "target": target}

    ret, loss, scalar_stats, image_stats = network_wrapper_forward(batch, params)
    jax.block_until_ready((ret, loss, scalar_stats, image_stats))

    # Pure-JAX reference of the hot path (same bf16 matmul inputs, f32 accumulation).
    x_flat = img.reshape(B, -1)
    pred_f32 = jnp.dot(x_flat.astype(jnp.bfloat16),
                       params["w"].astype(jnp.bfloat16),
                       preferred_element_type=jnp.float32) + params["b"]
    loss_ref = jnp.mean((pred_f32 - target) ** 2)
    # Kernel returns pred through a bf16 HBM round trip; loss uses the f32 path.
    pred_ref = pred_f32.astype(jnp.bfloat16).astype(jnp.float32)

    assert ret["pred"].shape == (B, D_out)
    assert jnp.allclose(ret["pred"], pred_ref, atol=2e-2, rtol=2e-2)
    assert jnp.allclose(loss, loss_ref, atol=1e-4, rtol=1e-4)
    assert jnp.allclose(scalar_stats["loss"], loss)
    assert image_stats == {}

    print("KERNEL_OK")
</pallas_src>

<mosaic_0001>
module attributes {stable_mosaic.version = 11 : i64} {
  func.func @kernel(%arg0: i32, %arg1: i32, %arg2: memref<2x1024xf32, #tpu.memory_space<vmem>>, %arg3: memref<1024x128xbf16, #tpu.memory_space<vmem>>, %arg4: memref<1x128xf32, #tpu.memory_space<vmem>>, %arg5: memref<2x32xf32, #tpu.memory_space<vmem>>, %arg6: memref<2x128xbf16, #tpu.memory_space<vmem>>, %arg7: memref<1x32xf32, #tpu.memory_space<vmem>>, %arg8: memref<2x128xf32, #tpu.memory_space<vmem>>) attributes {dimension_semantics = [#tpu.dimension_semantics<parallel>, #tpu.dimension_semantics<arbitrary>], iteration_bounds = array<i64: 1, 1>, scalar_prefetch = 0 : i64, scratch_operands = 1 : i64, tpu.core_type = #tpu.core_type<tc>, window_params = [{transform_indices = @transform_0, window_bounds = array<i64: 2, 1024>}, {transform_indices = @transform_1, window_bounds = array<i64: 1024, 128>}, {pipeline_mode = #tpu.pipeline_mode<synchronous>, transform_indices = @transform_2, window_bounds = array<i64: 1, 128>}, {transform_indices = @transform_3, window_bounds = array<i64: 2, 32>}, {transform_indices = @transform_4, window_bounds = array<i64: 2, 128>}, {transform_indices = @transform_5, window_bounds = array<i64: 1, 32>}]} {
    %c0_i32 = arith.constant 0 : i32
    %0 = arith.cmpi eq, %arg1, %c0_i32 : i32
    %1 = arith.extui %0 : i1 to i32
    %c0_i32_0 = arith.constant 0 : i32
    %2 = arith.cmpi ne, %1, %c0_i32_0 : i32
    scf.if %2 {
      %cst_10 = arith.constant 0.000000e+00 : f32
      %13 = vector.broadcast %cst_10 : f32 to vector<2x128xf32>
      %c0_11 = arith.constant 0 : index
      %c0_12 = arith.constant 0 : index
      %14 = vector.load %arg8[%c0_11, %c0_12] : memref<2x128xf32, #tpu.memory_space<vmem>>, vector<2x128xf32>
      tpu.vector_store %arg8[%c0_11, %c0_12], %13 {strides = array<i32>} : memref<2x128xf32, #tpu.memory_space<vmem>>, vector<2x128xf32>,
    } else {
    }
    %c0 = arith.constant 0 : index
    %c0_1 = arith.constant 0 : index
    %3 = vector.load %arg2[%c0, %c0_1] : memref<2x1024xf32, #tpu.memory_space<vmem>>, vector<2x1024xf32>
    %c0_2 = arith.constant 0 : index
    %c0_3 = arith.constant 0 : index
    %4 = vector.load %arg8[%c0_2, %c0_3] : memref<2x128xf32, #tpu.memory_space<vmem>>, vector<2x128xf32>
    %5 = arith.truncf %3 : vector<2x1024xf32> to vector<2x1024xbf16>
    %c0_4 = arith.constant 0 : index
    %c0_5 = arith.constant 0 : index
    %6 = vector.load %arg3[%c0_4, %c0_5] : memref<1024x128xbf16, #tpu.memory_space<vmem>>, vector<1024x128xbf16>
    %cst = arith.constant dense<0.000000e+00> : vector<2x128xf32>
    %7 = tpu.matmul %5, %6, %cst {dimension_numbers = #tpu.dot_dimension_numbers<[1], [0], [0], [1], [0, 0, 1, 1], [], []>} : vector<2x1024xbf16>, vector<1024x128xbf16>, vector<2x128xf32> -> vector<2x128xf32>
    %8 = arith.addf %4, %7 : vector<2x128xf32>
    %c0_6 = arith.constant 0 : index
    %c0_7 = arith.constant 0 : index
    %9 = vector.load %arg8[%c0_6, %c0_7] : memref<2x128xf32, #tpu.memory_space<vmem>>, vector<2x128xf32>
    tpu.vector_store %arg8[%c0_6, %c0_7], %8 {strides = array<i32>} : memref<2x128xf32, #tpu.memory_space<vmem>>, vector<2x128xf32>,
    %c0_i32_8 = arith.constant 0 : i32
    %10 = arith.cmpi eq, %arg1, %c0_i32_8 : i32
    %11 = arith.extui %10 : i1 to i32
    %c0_i32_9 = arith.constant 0 : i32
    %12 = arith.cmpi ne, %11, %c0_i32_9 : i32
    scf.if %12 {
      %c0_10 = arith.constant 0 : index
      %c0_11 = arith.constant 0 : index
      %13 = vector.load %arg8[%c0_10, %c0_11] : memref<2x128xf32, #tpu.memory_space<vmem>>, vector<2x128xf32>
      %c0_12 = arith.constant 0 : index
      %c0_13 = arith.constant 0 : index
      %14 = vector.load %arg4[%c0_12, %c0_13] : memref<1x128xf32, #tpu.memory_space<vmem>>, vector<1x128xf32>
      %15 = vector.broadcast %14 : vector<1x128xf32> to vector<2x128xf32>
      %16 = arith.addf %13, %15 : vector<2x128xf32>
      %17 = arith.truncf %16 : vector<2x128xf32> to vector<2x128xbf16>
      %c0_14 = arith.constant 0 : index
      %c0_15 = arith.constant 0 : index
      %18 = vector.load %arg6[%c0_14, %c0_15] : memref<2x128xbf16, #tpu.memory_space<vmem>>, vector<2x128xbf16>
      tpu.vector_store %arg6[%c0_14, %c0_15], %17 {strides = array<i32>} : memref<2x128xbf16, #tpu.memory_space<vmem>>, vector<2x128xbf16>,
      %c0_16 = arith.constant 0 : index
      %c0_17 = arith.constant 0 : index
      %19 = vector.load %arg8[%c0_16, %c0_17] : memref<2x128xf32, #tpu.memory_space<vmem>>, vector<2x32xf32>
      %c0_18 = arith.constant 0 : index
      %c0_19 = arith.constant 0 : index
      %20 = vector.load %arg4[%c0_18, %c0_19] : memref<1x128xf32, #tpu.memory_space<vmem>>, vector<1x32xf32>
      %21 = vector.broadcast %20 : vector<1x32xf32> to vector<2x32xf32>
      %22 = arith.addf %19, %21 : vector<2x32xf32>
      %c0_20 = arith.constant 0 : index
      %c0_21 = arith.constant 0 : index
      %23 = vector.load %arg5[%c0_20, %c0_21] : memref<2x32xf32, #tpu.memory_space<vmem>>, vector<2x32xf32>
      %24 = arith.subf %22, %23 : vector<2x32xf32>
      %25 = arith.mulf %24, %24 : vector<2x32xf32>
      %cst_22 = arith.constant dense<0.000000e+00> : vector<32xf32>
      %26 = vector.multi_reduction <add>, %25, %cst_22 [0] : vector<2x32xf32> to vector<32xf32>
      %27 = vector.shape_cast %26 : vector<32xf32> to vector<1x32xf32>
      %c0_23 = arith.constant 0 : index
      %c0_24 = arith.constant 0 : index
      %28 = vector.load %arg7[%c0_23, %c0_24] : memref<1x32xf32, #tpu.memory_space<vmem>>, vector<1x32xf32>
      tpu.vector_store %arg7[%c0_23, %c0_24], %27 {strides = array<i32>} : memref<1x32xf32, #tpu.memory_space<vmem>>, vector<1x32xf32>,
    } else {
    }
    return
  }
  func.func @transform_0(%arg0: i32, %arg1: i32) -> (i32, i32) {
    %c0_i32 = arith.constant 0 : i32
    return %arg0, %arg1 : i32, i32
  }
  func.func @transform_1(%arg0: i32, %arg1: i32) -> (i32, i32) {
    %c0_i32 = arith.constant 0 : i32
    %c0_i32_0 = arith.constant 0 : i32
    return %arg1, %c0_i32 : i32, i32
  }
  func.func @transform_2(%arg0: i32, %arg1: i32) -> (i32, i32) {
    %c0_i32 = arith.constant 0 : i32
    %c0_i32_0 = arith.constant 0 : i32
    %c0_i32_1 = arith.constant 0 : i32
    return %c0_i32, %c0_i32_0 : i32, i32
  }
  func.func @transform_3(%arg0: i32, %arg1: i32) -> (i32, i32) {
    %c0_i32 = arith.constant 0 : i32
    %c0_i32_0 = arith.constant 0 : i32
    return %arg0, %c0_i32 : i32, i32
  }
  func.func @transform_4(%arg0: i32, %arg1: i32) -> (i32, i32) {
    %c0_i32 = arith.constant 0 : i32
    %c0_i32_0 = arith.constant 0 : i32
    return %arg0, %c0_i32 : i32, i32
  }
  func.func @transform_5(%arg0: i32, %arg1: i32) -> (i32, i32) {
    %c0_i32 = arith.constant 0 : i32
    %c0_i32_0 = arith.constant 0 : i32
    return %arg0, %c0_i32 : i32, i32
  }
}

</mosaic_0001>

<llo_original>
// kernel: tpu_custom_call.1
$region0: #{tpu_custom_call.1}
  #allocation0 [shape = 'u32[]', space=smem, size = 0x4, offset = 0x4, fixed_abs, tag = 'smem constant byte address 0x4 - core index']
  #allocation1 [shape = 'u32[144,128]{1,0:T(1,128)}', space=vmem, size = 0x12000, scoped, tag = 'internal scratch']
  #allocation2 [shape = 'f32[2,128]{1,0:T(2,128)}', space=vmem, size = 0x400, scoped, tag = 'scratch operand']
  %s0 = inlined_call_operand.hbm [shape: f32[2,1024], index: 0, kind: input, shape index: {}]
  %s1 = inlined_call_operand.hbm [shape: bf16[1024,128], index: 1, kind: input, shape index: {}]
  %s2 = inlined_call_operand.vmem [shape: f32[1,128], index: 2, kind: input, shape index: {}]
  %s3 = inlined_call_operand.vmem [shape: f32[2,32], index: 3, kind: input, shape index: {}]
  %s4 = inlined_call_operand.hbm [shape: bf16[2,128], index: 4, kind: output, shape index: {0}]
  %s5 = inlined_call_operand.hbm [shape: f32[1,32], index: 5, kind: output, shape index: {1}]
  %6 = xla_tuple %s4, %s5
  %s7 = sld [smem:[#allocation0]]
  $region50: #{tpu_custom_call.1} parent=0
    _
  %s9 = ssub.s32 1, %s7
  %s10 = scalar_select 0, %s9, %s7
  $region1: #{tpu_custom_call.1} parent=0
    #allocation3 [shape = 'u8[8192]{0}', space=vmem, size = 0x2000, scoped, tag = 'input window, operand 0, single buffered']
    #allocation4 [shape = 's32[1]{0}', space=sflag, size = 0x4, scoped, tag = 'scoped memory for tpu_custom_call.1']
    #allocation5 [shape = 's32[1]{0}', space=sflag, size = 0x4, scoped, tag = 'scoped memory for tpu_custom_call.1']
    #allocation6 [shape = 'u8[262144]{0}', space=vmem, size = 0x40000, scoped, tag = 'input window, operand 1, single buffered']
    #allocation7 [shape = 's32[1]{0}', space=sflag, size = 0x4, scoped, tag = 'scoped memory for tpu_custom_call.1']
    #allocation8 [shape = 'u8[512]{0}', space=vmem, size = 0x400, scoped, tag = 'output window, operand 0, single buffered']
    #allocation9 [shape = 'u8[512]{0}', space=vmem, size = 0x400, scoped, tag = 'output window, operand 1, single buffered']
    #allocation10 [shape = 's32[1]{0}', space=sflag, size = 0x4, scoped, tag = 'scoped memory for tpu_custom_call.1']
    %11 = vsyncpa [#allocation4], 0
    %12 = vsyncpa [#allocation7], 0
    %13 = vsyncpa [#allocation5], 0
    %14 = vsyncpa [#allocation10], 0
    // Predicated region
    $region2: #{tpu_custom_call.1} parent=1 // pred_check
      _
    $region3: #{tpu_custom_call.1} parent=1 // pred_check_branch
      %16 = sbr.rel (0) target = $region5
    $region4: #{tpu_custom_call.1} parent=1 // pred_region
      %s18 = ssub.s32 256, 256
      %19 = vsyncadd [#allocation4], %s18
      %s21 = sshll.u32 [#allocation3], 4
      %s22 = int_to_ptr.vmem [resolvable:$true] %s21
      %24 = dma.hbm_to_vmem [thread:$0]  %s0, 256, %s22, [#allocation4]
    $region5: #{tpu_custom_call.1} parent=1 // pred_fallthru
      _
    // Predicated region
    $region6: #{tpu_custom_call.1} parent=1 // pred_check
      _
    $region7: #{tpu_custom_call.1} parent=1 // pred_check_branch
      %26 = sbr.rel (0) target = $region9
    $region8: #{tpu_custom_call.1} parent=1 // pred_region
      %s28 = ssub.s32 8192, 8192
      %29 = vsyncadd [#allocation7], %s28
      %s30 = sshll.u32 [#allocation6], 4
      %s31 = int_to_ptr.vmem [resolvable:$true] %s30
      %36 = dma.hbm_to_vmem [thread:$0]  %s1, 8192, %s31, [#allocation7], 64, 64, 4
    $region9: #{tpu_custom_call.1} parent=1 // pred_fallthru
      _
    // Predicated region
    $region10: #{tpu_custom_call.1} parent=1 // pred_check
      _
    $region11: #{tpu_custom_call.1} parent=1 // pred_check_branch
      %38 = sbr.rel (0) target = $region13
    $region12: #{tpu_custom_call.1} parent=1 // pred_region
      _
    $region13: #{tpu_custom_call.1} parent=1 // pred_fallthru
      _
    // Predicated region
    $region14: #{tpu_custom_call.1} parent=1 // pred_check
      _
    $region15: #{tpu_custom_call.1} parent=1 // pred_check_branch
      %40 = sbr.rel (0) target = $region17
    $region16: #{tpu_custom_call.1} parent=1 // pred_region
      _
    $region17: #{tpu_custom_call.1} parent=1 // pred_fallthru
      _
    // Predicated region
    $region18: #{tpu_custom_call.1} parent=1 // pred_check
      _
    $region19: #{tpu_custom_call.1} parent=1 // pred_check_branch
      %42 = sbr.rel (0) target = $region21
    $region20: #{tpu_custom_call.1} parent=1 // pred_region
      %43 = dma.done [#allocation4], 256
    $region21: #{tpu_custom_call.1} parent=1 // pred_fallthru
      _
    // Predicated region
    $region22: #{tpu_custom_call.1} parent=1 // pred_check
      _
    $region23: #{tpu_custom_call.1} parent=1 // pred_check_branch
      %45 = sbr.rel (0) target = $region25
    $region24: #{tpu_custom_call.1} parent=1 // pred_region
      %46 = dma.done [#allocation7], 8192
    $region25: #{tpu_custom_call.1} parent=1 // pred_fallthru
      _
    %p48 = scmp.eq.s32.totalorder 0, 0
    // Predicated region
    $region26: #{tpu_custom_call.1} parent=1 // pred_check
      %p49 = pneg %p48
    $region27: #{tpu_custom_call.1} parent=1 // pred_check_branch
      %51 = sbr.rel (%p49) target = $region29
    $region28: #{tpu_custom_call.1} parent=1 // pred_region
      %52 = vst [vmem:[#allocation2] sm:$0x3] 0.0
    $region29: #{tpu_custom_call.1} parent=1 // pred_fallthru
      _
    %v53 = vld [vmem:[#allocation3] sm:$0xff]
    %v54 = vld [vmem:[#allocation3 + $0x8] sm:$0xff]
    %v55 = vld [vmem:[#allocation2] sm:$0x3]
    %v58 = vcombine.high %v53, %v53
    %v60 = vunpack.c.l.s4 1983009808
    %v61 = vunpack.c.0.s8 %v60
    %v62 = vlaneseq
    %v63 = vshrl.u32 %v62, 7
    %v64 = vsub.s32 %v61, %v63
    %v65 = vrot.slane %v53, %v64
    %v67 = vunpack.c.l.s4 1983009808
    %v68 = vunpack.c.0.s8 %v67
    %v69 = vlaneseq
    %v70 = vshrl.u32 %v69, 7
    %v71 = vsub.s32 %v68, %v70
    %v72 = vrot.slane %v58, %v71
    %v73 = vcombine.high %v65, %v65
    %v74 = vcombine.high %v72, %v72
    %v75 = vcombine.high %v54, %v54
    %v77 = vunpack.c.l.s4 1983009808
    %v78 = vunpack.c.0.s8 %v77
    %v79 = vlaneseq
    %v80 = vshrl.u32 %v79, 7
    %v81 = vsub.s32 %v78, %v80
    %v82 = vrot.slane %v54, %v81
    %v84 = vunpack.c.l.s4 1983009808
    %v85 = vunpack.c.0.s8 %v84
    %v86 = vlaneseq
    %v87 = vshrl.u32 %v86, 7
    %v88 = vsub.s32 %v85, %v87
    %v89 = vrot.slane %v75, %v88
    %v90 = vcombine.high %v82, %v82
    %v91 = vcombine.high %v89, %v89
    %v100 = vpack.c.bf16 %v65, %v65
    %v101 = vpack.c.bf16 %v73, %v73
    %v102 = vpack.c.bf16 %v72, %v72
    %v103 = vpack.c.bf16 %v74, %v74
    %v104 = vpack.c.bf16 %v82, %v82
    %v105 = vpack.c.bf16 %v90, %v90
    %v106 = vpack.c.bf16 %v89, %v89
    %v107 = vpack.c.bf16 %v91, %v91
    %v108 = vld [vmem:[#allocation6] sm:$0xf]
    %v109 = vld [vmem:[#allocation6 + $0x4] sm:$0xf]
    %v110 = vld [vmem:[#allocation6 + $0x8] sm:$0xf]
    %v111 = vld [vmem:[#allocation6 + $0xc] sm:$0xf]
    %v112 = vld [vmem:[#allocation6 + $0x10] sm:$0xf]
    %v113 = vld [vmem:[#allocation6 + $0x14] sm:$0xf]
    %v114 = vld [vmem:[#allocation6 + $0x18] sm:$0xf]
    %v115 = vld [vmem:[#allocation6 + $0x1c] sm:$0xf]
    %v116 = vld [vmem:[#allocation6 + $0x20] sm:$0xf]
    %v117 = vld [vmem:[#allocation6 + $0x24] sm:$0xf]
    %v118 = vld [vmem:[#allocation6 + $0x28] sm:$0xf]
    %v119 = vld [vmem:[#allocation6 + $0x2c] sm:$0xf]
    %v120 = vld [vmem:[#allocation6 + $0x30] sm:$0xf]
    %v121 = vld [vmem:[#allocation6 + $0x34] sm:$0xf]
    %v122 = vld [vmem:[#allocation6 + $0x38] sm:$0xf]
    %v123 = vld [vmem:[#allocation6 + $0x3c] sm:$0xf]
    %v124 = vld [vmem:[#allocation6 + $0x40] sm:$0xf]
    %v125 = vld [vmem:[#allocation6 + $0x44] sm:$0xf]
    %v126 = vld [vmem:[#allocation6 + $0x48] sm:$0xf]
    %v127 = vld [vmem:[#allocation6 + $0x4c] sm:$0xf]
    %v128 = vld [vmem:[#allocation6 + $0x50] sm:$0xf]
    %v129 = vld [vmem:[#allocation6 + $0x54] sm:$0xf]
    %v130 = vld [vmem:[#allocation6 + $0x58] sm:$0xf]
    %v131 = vld [vmem:[#allocation6 + $0x5c] sm:$0xf]
    %v132 = vld [vmem:[#allocation6 + $0x60] sm:$0xf]
    %v133 = vld [vmem:[#allocation6 + $0x64] sm:$0xf]
    %v134 = vld [vmem:[#allocation6 + $0x68] sm:$0xf]
    %v135 = vld [vmem:[#allocation6 + $0x6c] sm:$0xf]
    %v136 = vld [vmem:[#allocation6 + $0x70] sm:$0xf]
    %v137 = vld [vmem:[#allocation6 + $0x74] sm:$0xf]
    %v138 = vld [vmem:[#allocation6 + $0x78] sm:$0xf]
    %v139 = vld [vmem:[#allocation6 + $0x7c] sm:$0xf]
    %v140 = vld [vmem:[#allocation6 + $0x80] sm:$0xf]
    %v141 = vld [vmem:[#allocation6 + $0x84] sm:$0xf]
    %v142 = vld [vmem:[#allocation6 + $0x88] sm:$0xf]
    %v143 = vld [vmem:[#allocation6 + $0x8c] sm:$0xf]
    %v144 = vld [vmem:[#allocation6 + $0x90] sm:$0xf]
    %v145 = vld [vmem:[#allocation6 + $0x94] sm:$0xf]
    %v146 = vld [vmem:[#allocation6 + $0x98] sm:$0xf]
    %v147 = vld [vmem:[#allocation6 + $0x9c] sm:$0xf]
    %v148 = vld [vmem:[#allocation6 + $0xa0] sm:$0xf]
    %v149 = vld [vmem:[#allocation6 + $0xa4] sm:$0xf]
    %v150 = vld [vmem:[#allocation6 + $0xa8] sm:$0xf]
    %v151 = vld [vmem:[#allocation6 + $0xac] sm:$0xf]
    %v152 = vld [vmem:[#allocation6 + $0xb0] sm:$0xf]
    %v153 = vld [vmem:[#allocation6 + $0xb4] sm:$0xf]
    %v154 = vld [vmem:[#allocation6 + $0xb8] sm:$0xf]
    %v155 = vld [vmem:[#allocation6 + $0xbc] sm:$0xf]
    %v156 = vld [vmem:[#allocation6 + $0xc0] sm:$0xf]
    %v157 = vld [vmem:[#allocation6 + $0xc4] sm:$0xf]
    %v158 = vld [vmem:[#allocation6 + $0xc8] sm:$0xf]
    %v159 = vld [vmem:[#allocation6 + $0xcc] sm:$0xf]
    %v160 = vld [vmem:[#allocation6 + $0xd0] sm:$0xf]
    %v161 = vld [vmem:[#allocation6 + $0xd4] sm:$0xf]
    %v162 = vld [vmem:[#allocation6 + $0xd8] sm:$0xf]
    %v163 = vld [vmem:[#allocation6 + $0xdc] sm:$0xf]
    %v164 = vld [vmem:[#allocation6 + $0xe0] sm:$0xf]
    %v165 = vld [vmem:[#allocation6 + $0xe4] sm:$0xf]
    %v166 = vld [vmem:[#allocation6 + $0xe8] sm:$0xf]
    %v167 = vld [vmem:[#allocation6 + $0xec] sm:$0xf]
    %v168 = vld [vmem:[#allocation6 + $0xf0] sm:$0xf]
    %v169 = vld [vmem:[#allocation6 + $0xf4] sm:$0xf]
    %v170 = vld [vmem:[#allocation6 + $0xf8] sm:$0xf]
    %v171 = vld [vmem:[#allocation6 + $0xfc] sm:$0xf]
    %v172 = vld [vmem:[#allocation6 + $0x100] sm:$0xf]
    %v173 = vld [vmem:[#allocation6 + $0x104] sm:$0xf]
    %v174 = vld [vmem:[#allocation6 + $0x108] sm:$0xf]
    %v175 = vld [vmem:[#allocation6 + $0x10c] sm:$0xf]
    %v176 = vld [vmem:[#allocation6 + $0x110] sm:$0xf]
    %v177 = vld [vmem:[#allocation6 + $0x114] sm:$0xf]
    %v178 = vld [vmem:[#allocation6 + $0x118] sm:$0xf]
    %v179 = vld [vmem:[#allocation6 + $0x11c] sm:$0xf]
    %v180 = vld [vmem:[#allocation6 + $0x120] sm:$0xf]
    %v181 = vld [vmem:[#allocation6 + $0x124] sm:$0xf]
    %v182 = vld [vmem:[#allocation6 + $0x128] sm:$0xf]
    %v183 = vld [vmem:[#allocation6 + $0x12c] sm:$0xf]
    %v184 = vld [vmem:[#allocation6 + $0x130] sm:$0xf]
    %v185 = vld [vmem:[#allocation6 + $0x134] sm:$0xf]
    %v186 = vld [vmem:[#allocation6 + $0x138] sm:$0xf]
    %v187 = vld [vmem:[#allocation6 + $0x13c] sm:$0xf]
    %v188 = vld [vmem:[#allocation6 + $0x140] sm:$0xf]
    %v189 = vld [vmem:[#allocation6 + $0x144] sm:$0xf]
    %v190 = vld [vmem:[#allocation6 + $0x148] sm:$0xf]
    %v191 = vld [vmem:[#allocation6 + $0x14c] sm:$0xf]
    %v192 = vld [vmem:[#allocation6 + $0x150] sm:$0xf]
    %v193 = vld [vmem:[#allocation6 + $0x154] sm:$0xf]
    %v194 = vld [vmem:[#allocation6 + $0x158] sm:$0xf]
    %v195 = vld [vmem:[#allocation6 + $0x15c] sm:$0xf]
    %v196 = vld [vmem:[#allocation6 + $0x160] sm:$0xf]
    %v197 = vld [vmem:[#allocation6 + $0x164] sm:$0xf]
    %v198 = vld [vmem:[#allocation6 + $0x168] sm:$0xf]
    %v199 = vld [vmem:[#allocation6 + $0x16c] sm:$0xf]
    %v200 = vld [vmem:[#allocation6 + $0x170] sm:$0xf]
    %v201 = vld [vmem:[#allocation6 + $0x174] sm:$0xf]
    %v202 = vld [vmem:[#allocation6 + $0x178] sm:$0xf]
    %v203 = vld [vmem:[#allocation6 + $0x17c] sm:$0xf]
    %v204 = vld [vmem:[#allocation6 + $0x180] sm:$0xf]
    %v205 = vld [vmem:[#allocation6 + $0x184] sm:$0xf]
    %v206 = vld [vmem:[#allocation6 + $0x188] sm:$0xf]
    %v207 = vld [vmem:[#allocation6 + $0x18c] sm:$0xf]
    %v208 = vld [vmem:[#allocation6 + $0x190] sm:$0xf]
    %v209 = vld [vmem:[#allocation6 + $0x194] sm:$0xf]
    %v210 = vld [vmem:[#allocation6 + $0x198] sm:$0xf]
    %v211 = vld [vmem:[#allocation6 + $0x19c] sm:$0xf]
    %v212 = vld [vmem:[#allocation6 + $0x1a0] sm:$0xf]
    %v213 = vld [vmem:[#allocation6 + $0x1a4] sm:$0xf]
    %v214 = vld [vmem:[#allocation6 + $0x1a8] sm:$0xf]
    %v215 = vld [vmem:[#allocation6 + $0x1ac] sm:$0xf]
    %v216 = vld [vmem:[#allocation6 + $0x1b0] sm:$0xf]
    %v217 = vld [vmem:[#allocation6 + $0x1b4] sm:$0xf]
    %v218 = vld [vmem:[#allocation6 + $0x1b8] sm:$0xf]
    %v219 = vld [vmem:[#allocation6 + $0x1bc] sm:$0xf]
    %v220 = vld [vmem:[#allocation6 + $0x1c0] sm:$0xf]
    %v221 = vld [vmem:[#allocation6 + $0x1c4] sm:$0xf]
    %v222 = vld [vmem:[#allocation6 + $0x1c8] sm:$0xf]
    %v223 = vld [vmem:[#allocation6 + $0x1cc] sm:$0xf]
    %v224 = vld [vmem:[#allocation6 + $0x1d0] sm:$0xf]
    %v225 = vld [vmem:[#allocation6 + $0x1d4] sm:$0xf]
    %v226 = vld [vmem:[#allocation6 + $0x1d8] sm:$0xf]
    %v227 = vld [vmem:[#allocation6 + $0x1dc] sm:$0xf]
    %v228 = vld [vmem:[#allocation6 + $0x1e0] sm:$0xf]
    %v229 = vld [vmem:[#allocation6 + $0x1e4] sm:$0xf]
    %v230 = vld [vmem:[#allocation6 + $0x1e8] sm:$0xf]
    %v231 = vld [vmem:[#allocation6 + $0x1ec] sm:$0xf]
    %v232 = vld [vmem:[#allocation6 + $0x1f0] sm:$0xf]
    %v233 = vld [vmem:[#allocation6 + $0x1f4] sm:$0xf]
    %v234 = vld [vmem:[#allocation6 + $0x1f8] sm:$0xf]
    %v235 = vld [vmem:[#allocation6 + $0x1fc] sm:$0xf]
    %v364 = vunpack.c.l.b16 %v108
    %v365 = vunpack.c.l.b16 %v109
    %v366 = vunpack.c.l.b16 %v110
    %v367 = vunpack.c.l.b16 %v111
    %v368 = vunpack.c.l.b16 %v112
    %v369 = vunpack.c.l.b16 %v113
    %v370 = vunpack.c.l.b16 %v114
    %v371 = vunpack.c.l.b16 %v115
    %v372 = vunpack.c.l.b16 %v116
    %v373 = vunpack.c.l.b16 %v117
    %v374 = vunpack.c.l.b16 %v118
    %v375 = vunpack.c.l.b16 %v119
    %v376 = vunpack.c.l.b16 %v120
    %v377 = vunpack.c.l.b16 %v121
    %v378 = vunpack.c.l.b16 %v122
    %v379 = vunpack.c.l.b16 %v123
    %v380 = vunpack.c.l.b16 %v124
    %v381 = vunpack.c.l.b16 %v125
    %v382 = vunpack.c.l.b16 %v126
    %v383 = vunpack.c.l.b16 %v127
    %v384 = vunpack.c.l.b16 %v128
    %v385 = vunpack.c.l.b16 %v129
    %v386 = vunpack.c.l.b16 %v130
    %v387 = vunpack.c.l.b16 %v131
    %v388 = vunpack.c.l.b16 %v132
    %v389 = vunpack.c.l.b16 %v133
    %v390 = vunpack.c.l.b16 %v134
    %v391 = vunpack.c.l.b16 %v135
    %v392 = vunpack.c.l.b16 %v136
    %v393 = vunpack.c.l.b16 %v137
    %v394 = vunpack.c.l.b16 %v138
    %v395 = vunpack.c.l.b16 %v139
    %v396 = vunpack.c.l.b16 %v140
    %v397 = vunpack.c.l.b16 %v141
    %v398 = vunpack.c.l.b16 %v142
    %v399 = vunpack.c.l.b16 %v143
    %v400 = vunpack.c.l.b16 %v144
    %v401 = vunpack.c.l.b16 %v145
    %v402 = vunpack.c.l.b16 %v146
    %v403 = vunpack.c.l.b16 %v147
    %v404 = vunpack.c.l.b16 %v148
    %v405 = vunpack.c.l.b16 %v149
    %v406 = vunpack.c.l.b16 %v150
    %v407 = vunpack.c.l.b16 %v151
    %v408 = vunpack.c.l.b16 %v152
    %v409 = vunpack.c.l.b16 %v153
    %v410 = vunpack.c.l.b16 %v154
    %v411 = vunpack.c.l.b16 %v155
    %v412 = vunpack.c.l.b16 %v156
    %v413 = vunpack.c.l.b16 %v157
    %v414 = vunpack.c.l.b16 %v158
    %v415 = vunpack.c.l.b16 %v159
    %v416 = vunpack.c.l.b16 %v160
    %v417 = vunpack.c.l.b16 %v161
    %v418 = vunpack.c.l.b16 %v162
    %v419 = vunpack.c.l.b16 %v163
    %v420 = vunpack.c.l.b16 %v164
    %v421 = vunpack.c.l.b16 %v165
    %v422 = vunpack.c.l.b16 %v166
    %v423 = vunpack.c.l.b16 %v167
    %v424 = vunpack.c.l.b16 %v168
    %v425 = vunpack.c.l.b16 %v169
    %v426 = vunpack.c.l.b16 %v170
    %v427 = vunpack.c.l.b16 %v171
    %v428 = vunpack.c.l.b16 %v172
    %v429 = vunpack.c.l.b16 %v173
    %v430 = vunpack.c.l.b16 %v174
    %v431 = vunpack.c.l.b16 %v175
    %v432 = vunpack.c.l.b16 %v176
    %v433 = vunpack.c.l.b16 %v177
    %v434 = vunpack.c.l.b16 %v178
    %v435 = vunpack.c.l.b16 %v179
    %v436 = vunpack.c.l.b16 %v180
    %v437 = vunpack.c.l.b16 %v181
    %v438 = vunpack.c.l.b16 %v182
    %v439 = vunpack.c.l.b16 %v183
    %v440 = vunpack.c.l.b16 %v184
    %v441 = vunpack.c.l.b16 %v185
    %v442 = vunpack.c.l.b16 %v186
    %v443 = vunpack.c.l.b16 %v187
    %v444 = vunpack.c.l.b16 %v188
    %v445 = vunpack.c.l.b16 %v189
    %v446 = vunpack.c.l.b16 %v190
    %v447 = vunpack.c.l.b16 %v191
    %v448 = vunpack.c.l.b16 %v192
    %v449 = vunpack.c.l.b16 %v193
    %v450 = vunpack.c.l.b16 %v194
    %v451 = vunpack.c.l.b16 %v195
    %v452 = vunpack.c.l.b16 %v196
    %v453 = vunpack.c.l.b16 %v197
    %v454 = vunpack.c.l.b16 %v198
    %v455 = vunpack.c.l.b16 %v199
    %v456 = vunpack.c.l.b16 %v200
    %v457 = vunpack.c.l.b16 %v201
    %v458 = vunpack.c.l.b16 %v202
    %v459 = vunpack.c.l.b16 %v203
    %v460 = vunpack.c.l.b16 %v204
    %v461 = vunpack.c.l.b16 %v205
    %v462 = vunpack.c.l.b16 %v206
    %v463 = vunpack.c.l.b16 %v207
    %v464 = vunpack.c.l.b16 %v208
    %v465 = vunpack.c.l.b16 %v209
    %v466 = vunpack.c.l.b16 %v210
    %v467 = vunpack.c.l.b16 %v211
    %v468 = vunpack.c.l.b16 %v212
    %v469 = vunpack.c.l.b16 %v213
    %v470 = vunpack.c.l.b16 %v214
    %v471 = vunpack.c.l.b16 %v215
    %v472 = vunpack.c.l.b16 %v216
    %v473 = vunpack.c.l.b16 %v217
    %v474 = vunpack.c.l.b16 %v218
    %v475 = vunpack.c.l.b16 %v219
    %v476 = vunpack.c.l.b16 %v220
    %v477 = vunpack.c.l.b16 %v221
    %v478 = vunpack.c.l.b16 %v222
    %v479 = vunpack.c.l.b16 %v223
    %v480 = vunpack.c.l.b16 %v224
    %v481 = vunpack.c.l.b16 %v225
    %v482 = vunpack.c.l.b16 %v226
    %v483 = vunpack.c.l.b16 %v227
    %v484 = vunpack.c.l.b16 %v228
    %v485 = vunpack.c.l.b16 %v229
    %v486 = vunpack.c.l.b16 %v230
    %v487 = vunpack.c.l.b16 %v231
    %v488 = vunpack.c.l.b16 %v232
    %v489 = vunpack.c.l.b16 %v233
    %v490 = vunpack.c.l.b16 %v234
    %v491 = vunpack.c.l.b16 %v235
    %v492 = vpack.c.b16 %v365, %v364
    %v493 = vpack.c.b16 %v367, %v366
    %v494 = vpack.c.b16 %v369, %v368
    %v495 = vpack.c.b16 %v371, %v370
    %v496 = vpack.c.b16 %v373, %v372
    %v497 = vpack.c.b16 %v375, %v374
    %v498 = vpack.c.b16 %v377, %v376
    %v499 = vpack.c.b16 %v379, %v378
    %v500 = vpack.c.b16 %v381, %v380
    %v501 = vpack.c.b16 %v383, %v382
    %v502 = vpack.c.b16 %v385, %v384
    %v503 = vpack.c.b16 %v387, %v386
    %v504 = vpack.c.b16 %v389, %v388
    %v505 = vpack.c.b16 %v391, %v390
    %v506 = vpack.c.b16 %v393, %v392
    %v507 = vpack.c.b16 %v395, %v394
    %v508 = vpack.c.b16 %v397, %v396
    %v509 = vpack.c.b16 %v399, %v398
    %v510 = vpack.c.b16 %v401, %v400
    %v511 = vpack.c.b16 %v403, %v402
    %v512 = vpack.c.b16 %v405, %v404
    %v513 = vpack.c.b16 %v407, %v406
    %v514 = vpack.c.b16 %v409, %v408
    %v515 = vpack.c.b16 %v411, %v410
    %v516 = vpack.c.b16 %v413, %v412
    %v517 = vpack.c.b16 %v415, %v414
    %v518 = vpack.c.b16 %v417, %v416
    %v519 = vpack.c.b16 %v419, %v418
    %v520 = vpack.c.b16 %v421, %v420
    %v521 = vpack.c.b16 %v423, %v422
    %v522 = vpack.c.b16 %v425, %v424
    %v523 = vpack.c.b16 %v427, %v426
    %v524 = vpack.c.b16 %v429, %v428
    %v525 = vpack.c.b16 %v431, %v430
    %v526 = vpack.c.b16 %v433, %v432
    %v527 = vpack.c.b16 %v435, %v434
    %v528 = vpack.c.b16 %v437, %v436
    %v529 = vpack.c.b16 %v439, %v438
    %v530 = vpack.c.b16 %v441, %v440
    %v531 = vpack.c.b16 %v443, %v442
    %v532 = vpack.c.b16 %v445, %v444
    %v533 = vpack.c.b16 %v447, %v446
    %v534 = vpack.c.b16 %v449, %v448
    %v535 = vpack.c.b16 %v451, %v450
    %v536 = vpack.c.b16 %v453, %v452
    %v537 = vpack.c.b16 %v455, %v454
    %v538 = vpack.c.b16 %v457, %v456
    %v539 = vpack.c.b16 %v459, %v458
    %v540 = vpack.c.b16 %v461, %v460
    %v541 = vpack.c.b16 %v463, %v462
    %v542 = vpack.c.b16 %v465, %v464
    %v543 = vpack.c.b16 %v467, %v466
    %v544 = vpack.c.b16 %v469, %v468
    %v545 = vpack.c.b16 %v471, %v470
    %v546 = vpack.c.b16 %v473, %v472
    %v547 = vpack.c.b16 %v475, %v474
    %v548 = vpack.c.b16 %v477, %v476
    %v549 = vpack.c.b16 %v479, %v478
    %v550 = vpack.c.b16 %v481, %v480
    %v551 = vpack.c.b16 %v483, %v482
    %v552 = vpack.c.b16 %v485, %v484
    %v553 = vpack.c.b16 %v487, %v486
    %v554 = vpack.c.b16 %v489, %v488
    %v555 = vpack.c.b16 %v491, %v490
    %620 = vmatprep.subr.bf16.mxu0 0
    %621 = vmatpush1.bf16.msra.mxu0 %v492
    %622 = vmatprep.subr.bf16.mxu0 0
    %623 = vmatpush1.bf16.msra.mxu0 %v493
    %624 = vmatprep.subr.bf16.mxu0 0
    %625 = vmatpush1.bf16.msra.mxu0 %v494
    %626 = vmatprep.subr.bf16.mxu0 0
    %627 = vmatpush1.bf16.msra.mxu0 %v495
    %628 = vmatprep.subr.bf16.mxu0 0
    %629 = vmatpush1.bf16.msra.mxu0 %v496
    %630 = vmatprep.subr.bf16.mxu0 0
    %631 = vmatpush1.bf16.msra.mxu0 %v497
    %632 = vmatprep.subr.bf16.mxu0 0
    %633 = vmatpush1.bf16.msra.mxu0 %v498
    %634 = vmatprep.subr.bf16.mxu0 0
    %635 = vmatpush1.bf16.msra.mxu0 %v499
    %636 = vmatprep.subr.bf16.mxu0 0
    %637 = vmatpush1.bf16.msra.mxu0 %v500
    %638 = vmatprep.subr.bf16.mxu0 0
    %639 = vmatpush1.bf16.msra.mxu0 %v501
    %640 = vmatprep.subr.bf16.mxu0 0
    %641 = vmatpush1.bf16.msra.mxu0 %v502
    %642 = vmatprep.subr.bf16.mxu0 0
    %643 = vmatpush1.bf16.msra.mxu0 %v503
    %644 = vmatprep.subr.bf16.mxu0 0
    %645 = vmatpush1.bf16.msra.mxu0 %v504
    %646 = vmatprep.subr.bf16.mxu0 0
    %647 = vmatpush1.bf16.msra.mxu0 %v505
    %648 = vmatprep.subr.bf16.mxu0 0
    %649 = vmatpush1.bf16.msra.mxu0 %v506
    %650 = vmatprep.subr.bf16.mxu0 0
    %651 = vmatpush1.bf16.msra.mxu0 %v507
    %652 = vmatprep.mubr.bf16.mxu0 %v101
    %653 = vmatmul.mubr.bf16.gmra.mrb[0].mxu0 %v100
    %v654 = vpop.f32.mrb[0].mxu0
    %v655 = vadd.f32 0.0, %v654
    %v656 = vpop.f32.mrb[0].mxu0
    %v657 = vpop.f32.mrb[0].mxu0
    %v658 = vpop.f32.mrb[0].mxu0
    %659 = vdwg.mxu0
    %660 = vmatprep.subr.bf16.mxu0 0
    %661 = vmatpush1.bf16.msra.mxu0 %v508
    %662 = vmatprep.subr.bf16.mxu0 0
    %663 = vmatpush1.bf16.msra.mxu0 %v509
    %664 = vmatprep.subr.bf16.mxu0 0
    %665 = vmatpush1.bf16.msra.mxu0 %v510
    %666 = vmatprep.subr.bf16.mxu0 0
    %667 = vmatpush1.bf16.msra.mxu0 %v511
    %668 = vmatprep.subr.bf16.mxu0 0
    %669 = vmatpush1.bf16.msra.mxu0 %v512
    %670 = vmatprep.subr.bf16.mxu0 0
    %671 = vmatpush1.bf16.msra.mxu0 %v513
    %672 = vmatprep.subr.bf16.mxu0 0
    %673 = vmatpush1.bf16.msra.mxu0 %v514
    %674 = vmatprep.subr.bf16.mxu0 0
    %675 = vmatpush1.bf16.msra.mxu0 %v515
    %676 = vmatprep.subr.bf16.mxu0 0
    %677 = vmatpush1.bf16.msra.mxu0 %v516
    %678 = vmatprep.subr.bf16.mxu0 0
    %679 = vmatpush1.bf16.msra.mxu0 %v517
    %680 = vmatprep.subr.bf16.mxu0 0
    %681 = vmatpush1.bf16.msra.mxu0 %v518
    %682 = vmatprep.subr.bf16.mxu0 0
    %683 = vmatpush1.bf16.msra.mxu0 %v519
    %684 = vmatprep.subr.bf16.mxu0 0
    %685 = vmatpush1.bf16.msra.mxu0 %v520
    %686 = vmatprep.subr.bf16.mxu0 0
    %687 = vmatpush1.bf16.msra.mxu0 %v521
    %688 = vmatprep.subr.bf16.mxu0 0
    %689 = vmatpush1.bf16.msra.mxu0 %v522
    %690 = vmatprep.subr.bf16.mxu0 0
    %691 = vmatpush1.bf16.msra.mxu0 %v523
    %692 = vmatprep.mubr.bf16.mxu0 %v103
    %693 = vmatmul.mubr.bf16.gmra.mrb[0].mxu0 %v102
    %v694 = vpop.f32.mrb[0].mxu0
    %v695 = vadd.f32 %v655, %v694
    %v696 = vpop.f32.mrb[0].mxu0
    %v697 = vpop.f32.mrb[0].mxu0
    %v698 = vpop.f32.mrb[0].mxu0
    %699 = vdwg.mxu0
    %700 = vmatprep.subr.bf16.mxu0 0
    %701 = vmatpush1.bf16.msra.mxu0 %v524
    %702 = vmatprep.subr.bf16.mxu0 0
    %703 = vmatpush1.bf16.msra.mxu0 %v525
    %704 = vmatprep.subr.bf16.mxu0 0
    %705 = vmatpush1.bf16.msra.mxu0 %v526
    %706 = vmatprep.subr.bf16.mxu0 0
    %707 = vmatpush1.bf16.msra.mxu0 %v527
    %708 = vmatprep.subr.bf16.mxu0 0
    %709 = vmatpush1.bf16.msra.mxu0 %v528
    %710 = vmatprep.subr.bf16.mxu0 0
    %711 = vmatpush1.bf16.msra.mxu0 %v529
    %712 = vmatprep.subr.bf16.mxu0 0
    %713 = vmatpush1.bf16.msra.mxu0 %v530
    %714 = vmatprep.subr.bf16.mxu0 0
    %715 = vmatpush1.bf16.msra.mxu0 %v531
    %716 = vmatprep.subr.bf16.mxu0 0
    %717 = vmatpush1.bf16.msra.mxu0 %v532
    %718 = vmatprep.subr.bf16.mxu0 0
    %719 = vmatpush1.bf16.msra.mxu0 %v533
    %720 = vmatprep.subr.bf16.mxu0 0
    %721 = vmatpush1.bf16.msra.mxu0 %v534
    %722 = vmatprep.subr.bf16.mxu0 0
    %723 = vmatpush1.bf16.msra.mxu0 %v535
    %724 = vmatprep.subr.bf16.mxu0 0
    %725 = vmatpush1.bf16.msra.mxu0 %v536
    %726 = vmatprep.subr.bf16.mxu0 0
    %727 = vmatpush1.bf16.msra.mxu0 %v537
    %728 = vmatprep.subr.bf16.mxu0 0
    %729 = vmatpush1.bf16.msra.mxu0 %v538
    %730 = vmatprep.subr.bf16.mxu0 0
    %731 = vmatpush1.bf16.msra.mxu0 %v539
    %732 = vmatprep.mubr.bf16.mxu0 %v105
    %733 = vmatmul.mubr.bf16.gmra.mrb[0].mxu0 %v104
    %v734 = vpop.f32.mrb[0].mxu0
    %v735 = vadd.f32 %v695, %v734
    %v736 = vpop.f32.mrb[0].mxu0
    %v737 = vpop.f32.mrb[0].mxu0
    %v738 = vpop.f32.mrb[0].mxu0
    %739 = vdwg.mxu0
    %740 = vmatprep.subr.bf16.mxu0 0
    %741 = vmatpush1.bf16.msra.mxu0 %v540
    %742 = vmatprep.subr.bf16.mxu0 0
    %743 = vmatpush1.bf16.msra.mxu0 %v541
    %744 = vmatprep.subr.bf16.mxu0 0
    %745 = vmatpush1.bf16.msra.mxu0 %v542
    %746 = vmatprep.subr.bf16.mxu0 0
    %747 = vmatpush1.bf16.msra.mxu0 %v543
    %748 = vmatprep.subr.bf16.mxu0 0
    %749 = vmatpush1.bf16.msra.mxu0 %v544
    %750 = vmatprep.subr.bf16.mxu0 0
    %751 = vmatpush1.bf16.msra.mxu0 %v545
    %752 = vmatprep.subr.bf16.mxu0 0
    %753 = vmatpush1.bf16.msra.mxu0 %v546
    %754 = vmatprep.subr.bf16.mxu0 0
    %755 = vmatpush1.bf16.msra.mxu0 %v547
    %756 = vmatprep.subr.bf16.mxu0 0
    %757 = vmatpush1.bf16.msra.mxu0 %v548
    %758 = vmatprep.subr.bf16.mxu0 0
    %759 = vmatpush1.bf16.msra.mxu0 %v549
    %760 = vmatprep.subr.bf16.mxu0 0
    %761 = vmatpush1.bf16.msra.mxu0 %v550
    %762 = vmatprep.subr.bf16.mxu0 0
    %763 = vmatpush1.bf16.msra.mxu0 %v551
    %764 = vmatprep.subr.bf16.mxu0 0
    %765 = vmatpush1.bf16.msra.mxu0 %v552
    %766 = vmatprep.subr.bf16.mxu0 0
    %767 = vmatpush1.bf16.msra.mxu0 %v553
    %768 = vmatprep.subr.bf16.mxu0 0
    %769 = vmatpush1.bf16.msra.mxu0 %v554
    %770 = vmatprep.subr.bf16.mxu0 0
    %771 = vmatpush1.bf16.msra.mxu0 %v555
    %772 = vmatprep.mubr.bf16.mxu0 %v107
    %773 = vmatmul.mubr.bf16.gmra.mrb[0].mxu0 %v106
    %v774 = vpop.f32.mrb[0].mxu0
    %v775 = vadd.f32 %v735, %v774
    %v776 = vpop.f32.mrb[0].mxu0
    %v777 = vpop.f32.mrb[0].mxu0
    %v778 = vpop.f32.mrb[0].mxu0
    %779 = vdwg.mxu0
    %v780 = vadd.f32 %v55, %v775
    %781 = vst [vmem:[#allocation2] sm:$0x3] %v780
    // Predicated region
    $region30: #{tpu_custom_call.1} parent=1 // pred_check
      %p782 = pneg %p48
    $region31: #{tpu_custom_call.1} parent=1 // pred_check_branch
      %784 = sbr.rel (%p782) target = $region33
    $region32: #{tpu_custom_call.1} parent=1 // pred_region
      %v785 = vld [vmem:[#allocation2] sm:$0x3]
      %v786 = vld [vmem:[%s2] sm:$0x1]
      %v788 = vlaneseq
      %v789 = vshrl.u32 %v788, 7
      %v790 = vsub.s32 0, %v789
      %v791 = vrot.slane %v786, %v790
      %v793 = vadd.f32 %v785, %v791
      %v794 = vpack.c.bf16 %v793, %v793
      %795 = vst [vmem:[#allocation8] sm:$0x1] %v794
      %v796 = vld [vmem:[#allocation2] sm:$0x3]
      %v797 = vld [vmem:[%s2] sm:$0x1]
      %v799 = vlaneseq
      %v800 = vshrl.u32 %v799, 7
      %v801 = vsub.s32 0, %v800
      %v802 = vrot.slane %v797, %v801
      %v804 = vadd.f32 %v796, %v802
      %v805 = vld [vmem:[%s3] sm:$0x3]
      %v806 = vsub.f32 %v804, %v805
      %v807 = vmul.f32 %v806, %v806
      %vm808 = vcmask 254976
      %v809 = vsel %vm808, %v807, 0.0
      %v810 = vrot.slane %v809, 4
      %v811 = vadd.f32 %v809, %v810
      %v812 = vrot.slane %v811, 2
      %v813 = vadd.f32 %v811, %v812
      %v814 = vrot.slane %v813, 1
      %v815 = vadd.f32 %v813, %v814
      %vm816 = vcmask 253952
      %817 = vst.msk [vmem:[#allocation9] sm:$0x1] %vm816, %v815
    $region33: #{tpu_custom_call.1} parent=1 // pred_fallthru
      _
    // Predicated region
    $region34: #{tpu_custom_call.1} parent=1 // pred_check
      _
    $region35: #{tpu_custom_call.1} parent=1 // pred_check_branch
      %819 = sbr.rel (0) target = $region37
    $region36: #{tpu_custom_call.1} parent=1 // pred_region
      %s821 = ssub.s32 16, 16
      %822 = vsyncadd [#allocation5], %s821
      %s824 = sshll.u32 [#allocation8], 4
      %s825 = int_to_ptr.vmem [resolvable:$true] %s824
      %827 = dma.vmem_to_hbm [thread:$0]  %s825, 16, %s4, [#allocation5]
    $region37: #{tpu_custom_call.1} parent=1 // pred_fallthru
      _
    // Predicated region
    $region38: #{tpu_custom_call.1} parent=1 // pred_check
      _
    $region39: #{tpu_custom_call.1} parent=1 // pred_check_branch
      %829 = sbr.rel (0) target = $region41
    $region40: #{tpu_custom_call.1} parent=1 // pred_region
      %s831 = ssub.s32 16, 16
      %832 = vsyncadd [#allocation10], %s831
      %s834 = sshll.u32 [#allocation9], 4
      %s835 = int_to_ptr.vmem [resolvable:$true] %s834
      %837 = dma.vmem_to_hbm [thread:$0]  %s835, 16, %s5, [#allocation10]
    $region41: #{tpu_custom_call.1} parent=1 // pred_fallthru
      _
    // Predicated region
    $region42: #{tpu_custom_call.1} parent=1 // pred_check
      _
    $region43: #{tpu_custom_call.1} parent=1 // pred_check_branch
      %839 = sbr.rel (0) target = $region45
    $region44: #{tpu_custom_call.1} parent=1 // pred_region
      %840 = dma.done [#allocation5], 16
    $region45: #{tpu_custom_call.1} parent=1 // pred_fallthru
      _
    // Predicated region
    $region46: #{tpu_custom_call.1} parent=1 // pred_check
      _
    $region47: #{tpu_custom_call.1} parent=1 // pred_check_branch
      %842 = sbr.rel (0) target = $region49
    $region48: #{tpu_custom_call.1} parent=1 // pred_region
      %843 = dma.done [#allocation10], 16
    $region49: #{tpu_custom_call.1} parent=1 // pred_fallthru
      _
    %844 = vsyncpa [#allocation4], 1
    %845 = vsyncpa [#allocation7], 1
    %846 = vsyncpa [#allocation5], 1
    %847 = vsyncpa [#allocation10], 1

</llo_original>
